<compile_context>
chip_gen: v5e
topology: v5e:2x2
jax: 0.10.0
libtpu: 0.0.40
codegen_flags: <defaults>
</compile_context>

<pallas_src>
import functools

import numpy as np
import jax
import jax.numpy as jnp
from jax.experimental import pallas as pl
from jax.experimental.pallas import tpu as pltpu


def _quant_kernel(x_ref, e_ref, o_ref, *, B: int, tn_sub: int, num_sub: int):
    """x_ref: (TB, num_sub*tn_sub) f32; e_ref: (tn_sub, tn_sub*B) bf16;
    o_ref: (TB, num_sub*tn_sub*B) out_dtype."""
    step = jnp.float32(2.0 ** B)
    e = e_ref[...]  # resident bf16 expansion matrix, loaded once per step
    # Static Python loop over 128-wide sub-blocks: static slices (zero runtime cost),
    # MXU contraction width stays tn_sub regardless of how wide the DMA tile is.
    for s in range(num_sub):
        x = x_ref[:, s * tn_sub:(s + 1) * tn_sub]
        q = jnp.round(x * step - jnp.float32(0.5))
        qi = q.astype(jnp.int32) & 0xFF  # emulate torch uint8 cast (wrap mod 256)
        # int32 -> f32 -> bf16 kept as two steps for guaranteed Mosaic lowering;
        # exact for values <= 255.
        qb = qi.astype(jnp.float32).astype(jnp.bfloat16)
        # Lane-expand + per-bit scale on the MXU: col n*B+b holds qi[:, n] * 2**-(B-1-b).
        qrep = jnp.dot(qb, e, preferred_element_type=jnp.float32)
        # bit = floor(qi / 2**(B-1-b)) & 1  (qrep >= 0, trunc == floor); bulk store.
        o_ref[:, s * tn_sub * B:(s + 1) * tn_sub * B] = (
            (qrep.astype(jnp.int32) & 1).astype(o_ref.dtype))


def _expansion_matrix(tn: int, B: int) -> np.ndarray:
    """E[n, n*B + b] = 2**-(B-1-b); exact powers of two, built statically."""
    e = np.zeros((tn, tn * B), dtype=np.float32)
    for n in range(tn):
        for b in range(B):
            e[n, n * B + b] = 2.0 ** -(B - 1 - b)
    return e


def quantization_layer(x: jax.Array, B: int, out_dtype=jnp.float32) -> jax.Array:
    """Pallas implementation of QuantizationLayer.forward.

    x: (batch, N) float32.
    returns: (batch, N*B) out_dtype (default float32, matching torch) of {0., 1.}
             bits, MSB-of-B first per element.
    """
    assert 1 <= B <= 8, "B must fit in a uint8 bit-width"
    batch, n = x.shape
    out_itemsize = jnp.dtype(out_dtype).itemsize

    # Matmul sub-block width: lane-aligned 128 (safe for v5e's 4x128 MXU at 197 TF/s);
    # full-N block when N < 128 (always legal w.r.t. the (8,128) rule).
    tn_sub = 128 if n >= 128 else n
    # DMA tile: up to 4 sub-blocks per grid step (big-tile DMA + step-overhead
    # amortization without growing per-element MXU FLOPs).
    num_sub = max(1, min(4, pl.cdiv(n, tn_sub)))
    tn_dma = num_sub * tn_sub

    # Batch tile: largest that keeps double-buffered (in + out) tiles under ~26 MiB
    # (v5e-safe once vmem_limit_bytes is raised; well under v7x's 64 MiB physical).
    tile_budget = 26 * 1024 * 1024
    per_row = 2 * (tn_dma * 4 + tn_dma * B * out_itemsize)  # double-buffered bytes/row
    tb_cap = max(8, (tile_budget // per_row) // 8 * 8)
    tb = batch if batch <= tb_cap else tb_cap

    gb, gn = pl.cdiv(batch, tb), pl.cdiv(n, tn_dma)
    # Megacore balance (v7x): avoid a (1, 1) grid when there is enough batch to split.
    if gb == 1 and gn == 1 and batch >= 16:
        tb = ((batch + 1) // 2 + 7) // 8 * 8
        gb = pl.cdiv(batch, tb)
    grid = (gb, gn)

    e = jnp.asarray(_expansion_matrix(tn_sub, B), dtype=jnp.bfloat16)
    kernel = functools.partial(_quant_kernel, B=B, tn_sub=tn_sub, num_sub=num_sub)

    cost = pl.CostEstimate(
        flops=2 * batch * n * B * tn_sub,          # MXU interleave work
        transcendentals=0,
        bytes_accessed=batch * n * 4 + batch * n * B * out_itemsize + e.size * 2,
    )

    return pl.pallas_call(
        kernel,
        out_shape=jax.ShapeDtypeStruct((batch, n * B), out_dtype),
        grid_spec=pltpu.PrefetchScalarGridSpec(
            num_scalar_prefetch=0,
            grid=grid,
            in_specs=[
                pl.BlockSpec((tb, tn_dma), lambda i, j: (i, j)),
                # Constant block index -> copied into VMEM once and stays resident;
                # single-buffered since it never changes (frees one E-sized buffer).
                pl.BlockSpec((tn_sub, tn_sub * B), lambda i, j: (0, 0),
                             pipeline_mode=pl.Buffered(1)),
            ],
            out_specs=pl.BlockSpec((tb, tn_dma * B), lambda i, j: (i, j)),
        ),
        compiler_params=pltpu.CompilerParams(
            dimension_semantics=("parallel", "parallel"),
            vmem_limit_bytes=40 * 1024 * 1024,
        ),
        cost_estimate=cost,
    )(x, e)


def _reference(x: jax.Array, B: int) -> jax.Array:
    """Pure-JAX reference mirroring the PyTorch code (sanity check)."""
    step = 2 ** B
    q = jnp.round(x * step - 0.5).astype(jnp.int32) & 0xFF
    shifts = jnp.arange(B - 1, -1, -1)  # MSB-of-B first
    bits = (q[:, :, None] >> shifts[None, None, :]) & 1
    return bits.reshape(x.shape[0], x.shape[1] * B).astype(jnp.float32)


if __name__ == "__main__":
    B = 4

    # Small demo shape (the module takes a 2-D (batch, features) input).
    x_small = jax.random.uniform(jax.random.PRNGKey(0), (2, 32), dtype=jnp.float32)
    out_small = jax.block_until_ready(quantization_layer(x_small, B))
    assert out_small.shape == (2, 32 * B), out_small.shape
    assert out_small.dtype == jnp.float32, out_small.dtype
    assert bool(jnp.all(out_small == _reference(x_small, B))), "mismatch (small)"

    # Lane-aligned shape exercising the multi-sub-block / multi-step grid path.
    x_big = jax.random.uniform(jax.random.PRNGKey(0), (16, 256), dtype=jnp.float32)
    out_big = jax.block_until_ready(quantization_layer(x_big, B))
    assert out_big.shape == (16, 256 * B), out_big.shape
    assert bool(jnp.all(out_big == _reference(x_big, B))), "mismatch (tiled)"

    print("KERNEL_OK")
</pallas_src>

<mosaic_0001>
module attributes {stable_mosaic.version = 11 : i64} {
  func.func @_quant_kernel(%arg0: i32, %arg1: i32, %arg2: memref<2x32xf32, #tpu.memory_space<vmem>>, %arg3: memref<32x128xbf16, #tpu.memory_space<vmem>>, %arg4: memref<2x128xf32, #tpu.memory_space<vmem>>) attributes {dimension_semantics = [#tpu.dimension_semantics<parallel>, #tpu.dimension_semantics<parallel>], iteration_bounds = array<i64: 1, 1>, scalar_prefetch = 0 : i64, scratch_operands = 0 : i64, tpu.core_type = #tpu.core_type<tc>, window_params = [{transform_indices = @transform_0, window_bounds = array<i64: 2, 32>}, {pipeline_mode = #tpu.pipeline_mode<synchronous>, transform_indices = @transform_1, window_bounds = array<i64: 32, 128>}, {transform_indices = @transform_2, window_bounds = array<i64: 2, 128>}]} {
    %c0 = arith.constant 0 : index
    %c0_0 = arith.constant 0 : index
    %0 = vector.load %arg3[%c0, %c0_0] : memref<32x128xbf16, #tpu.memory_space<vmem>>, vector<32x128xbf16>
    %c0_1 = arith.constant 0 : index
    %c0_2 = arith.constant 0 : index
    %1 = vector.load %arg2[%c0_1, %c0_2] : memref<2x32xf32, #tpu.memory_space<vmem>>, vector<2x32xf32>
    %cst = arith.constant 1.600000e+01 : f32
    %2 = vector.broadcast %cst : f32 to vector<2x32xf32>
    %3 = arith.mulf %1, %2 : vector<2x32xf32>
    %cst_3 = arith.constant 5.000000e-01 : f32
    %4 = vector.broadcast %cst_3 : f32 to vector<2x32xf32>
    %5 = arith.subf %3, %4 : vector<2x32xf32>
    %6 = math.roundeven %5 : vector<2x32xf32>
    %7 = arith.fptosi %6 : vector<2x32xf32> to vector<2x32xi32>
    %c255_i32 = arith.constant 255 : i32
    %8 = vector.broadcast %c255_i32 : i32 to vector<2x32xi32>
    %9 = arith.andi %7, %8 : vector<2x32xi32>
    %10 = arith.sitofp %9 : vector<2x32xi32> to vector<2x32xf32>
    %11 = arith.truncf %10 : vector<2x32xf32> to vector<2x32xbf16>
    %cst_4 = arith.constant dense<0.000000e+00> : vector<2x128xf32>
    %12 = tpu.matmul %11, %0, %cst_4 {dimension_numbers = #tpu.dot_dimension_numbers<[1], [0], [0], [1], [0, 0, 1, 1], [], []>} : vector<2x32xbf16>, vector<32x128xbf16>, vector<2x128xf32> -> vector<2x128xf32>
    %13 = arith.fptosi %12 : vector<2x128xf32> to vector<2x128xi32>
    %c1_i32 = arith.constant 1 : i32
    %14 = vector.broadcast %c1_i32 : i32 to vector<2x128xi32>
    %15 = arith.andi %13, %14 : vector<2x128xi32>
    %16 = arith.sitofp %15 : vector<2x128xi32> to vector<2x128xf32>
    %c0_5 = arith.constant 0 : index
    %c0_6 = arith.constant 0 : index
    %17 = vector.load %arg4[%c0_5, %c0_6] : memref<2x128xf32, #tpu.memory_space<vmem>>, vector<2x128xf32>
    tpu.vector_store %arg4[%c0_5, %c0_6], %16 {strides = array<i32>} : memref<2x128xf32, #tpu.memory_space<vmem>>, vector<2x128xf32>,
    return
  }
  func.func @transform_0(%arg0: i32, %arg1: i32) -> (i32, i32) {
    %c0_i32 = arith.constant 0 : i32
    return %arg0, %arg1 : i32, i32
  }
  func.func @transform_1(%arg0: i32, %arg1: i32) -> (i32, i32) {
    %c0_i32 = arith.constant 0 : i32
    %c0_i32_0 = arith.constant 0 : i32
    %c0_i32_1 = arith.constant 0 : i32
    return %c0_i32, %c0_i32_0 : i32, i32
  }
  func.func @transform_2(%arg0: i32, %arg1: i32) -> (i32, i32) {
    %c0_i32 = arith.constant 0 : i32
    return %arg0, %arg1 : i32, i32
  }
}

</mosaic_0001>

<llo_original>
// kernel: tpu_custom_call.1
$region0: #{tpu_custom_call.1}
  #allocation0 [shape = 'u32[]', space=smem, size = 0x4, offset = 0x4, fixed_abs, tag = 'smem constant byte address 0x4 - core index']
  #allocation1 [shape = 'u32[72,128]{1,0:T(1,128)}', space=vmem, size = 0x9000, scoped, tag = 'internal scratch']
  %s0 = inlined_call_operand.hbm [shape: f32[2,32], index: 0, kind: input, shape index: {}]
  %s1 = inlined_call_operand.hbm [shape: bf16[32,128], index: 1, kind: input, shape index: {}]
  %s2 = inlined_call_operand.hbm [shape: f32[2,128], index: 2, kind: output, shape index: {}]
  %s3 = sld [smem:[#allocation0]]
  $region26: #{tpu_custom_call.1} parent=0
    _
  %s5 = ssub.s32 1, %s3
  %s6 = scalar_select 0, %s5, %s3
  $region1: #{tpu_custom_call.1} parent=0
    #allocation2 [shape = 'u8[1024]{0}', space=vmem, size = 0x400, scoped, tag = 'input window, operand 0, single buffered']
    #allocation3 [shape = 's32[1]{0}', space=sflag, size = 0x4, scoped, tag = 'scoped memory for tpu_custom_call.1']
    #allocation4 [shape = 's32[1]{0}', space=sflag, size = 0x4, scoped, tag = 'scoped memory for tpu_custom_call.1']
    #allocation5 [shape = 'u8[8192]{0}', space=vmem, size = 0x2000, scoped, tag = 'input window, operand 1, single buffered']
    #allocation6 [shape = 's32[1]{0}', space=sflag, size = 0x4, scoped, tag = 'scoped memory for tpu_custom_call.1']
    #allocation7 [shape = 'u8[1024]{0}', space=vmem, size = 0x400, scoped, tag = 'output window, operand 0, single buffered']
    %7 = vsyncpa [#allocation3], 0
    %8 = vsyncpa [#allocation6], 0
    %9 = vsyncpa [#allocation4], 0
    // Predicated region
    $region2: #{tpu_custom_call.1} parent=1 // pred_check
      _
    $region3: #{tpu_custom_call.1} parent=1 // pred_check_branch
      %11 = sbr.rel (0) target = $region5
    $region4: #{tpu_custom_call.1} parent=1 // pred_region
      %13 = vsyncadd [#allocation3], 0
      %s15 = sshll.u32 %s0, 4
      %s16 = int_to_ptr.hbm [resolvable:$true] %s15
      %s17 = sshll.u32 [#allocation2], 4
      %s18 = int_to_ptr.vmem [resolvable:$true] %s17
      %20 = dma.hbm_to_vmem [thread:$0]  %s16, 32, %s18, [#allocation3]
    $region5: #{tpu_custom_call.1} parent=1 // pred_fallthru
      _
    // Predicated region
    $region6: #{tpu_custom_call.1} parent=1 // pred_check
      _
    $region7: #{tpu_custom_call.1} parent=1 // pred_check_branch
      %22 = sbr.rel (0) target = $region9
    $region8: #{tpu_custom_call.1} parent=1 // pred_region
      %24 = vsyncadd [#allocation6], 0
      %s25 = sshll.u32 %s1, 4
      %s26 = int_to_ptr.hbm [resolvable:$true] %s25
      %s27 = sshll.u32 [#allocation5], 4
      %s28 = int_to_ptr.vmem [resolvable:$true] %s27
      %33 = dma.hbm_to_vmem [thread:$0]  %s26, 256, %s28, [#allocation6], 64, 64, 4
    $region9: #{tpu_custom_call.1} parent=1 // pred_fallthru
      _
    // Predicated region
    $region10: #{tpu_custom_call.1} parent=1 // pred_check
      _
    $region11: #{tpu_custom_call.1} parent=1 // pred_check_branch
      %35 = sbr.rel (0) target = $region13
    $region12: #{tpu_custom_call.1} parent=1 // pred_region
      %37 = dma.done [#allocation3], 32
    $region13: #{tpu_custom_call.1} parent=1 // pred_fallthru
      _
    // Predicated region
    $region14: #{tpu_custom_call.1} parent=1 // pred_check
      _
    $region15: #{tpu_custom_call.1} parent=1 // pred_check_branch
      %39 = sbr.rel (0) target = $region17
    $region16: #{tpu_custom_call.1} parent=1 // pred_region
      %41 = dma.done [#allocation6], 256
    $region17: #{tpu_custom_call.1} parent=1 // pred_fallthru
      _
    %v43 = vld [vmem:[#allocation5] sm:$0xf]
    %v44 = vld [vmem:[#allocation5 + $0x4] sm:$0xf]
    %v45 = vld [vmem:[#allocation5 + $0x8] sm:$0xf]
    %v46 = vld [vmem:[#allocation5 + $0xc] sm:$0xf]
    %v47 = vld [vmem:[#allocation2] sm:$0x3]
    %v48 = vmul.f32 %v47, 16.0
    %v49 = vsub.f32 %v48, 0.5
    %v50 = vcvt.f32.s32.ties.to.even %v49
    %v51 = vand.u32 %v50, 255
    %v52 = vcvt.s32.f32 %v51
    %v53 = vpack.c.bf16 %v52, %v52
    %v58 = vunpack.c.l.b16 %v43
    %v59 = vunpack.c.l.b16 %v44
    %v60 = vunpack.c.l.b16 %v45
    %v61 = vunpack.c.l.b16 %v46
    %v62 = vpack.c.b16 %v59, %v58
    %v63 = vpack.c.b16 %v61, %v60
    %vm66 = vcmask 261120
    %v68 = vsel %vm66, %v53, 0
    %70 = vmatpush.bf16.msra.mxu0 0
    %71 = vmatpush.bf16.msra.mxu0 0
    %72 = vmatpush.bf16.msra.mxu0 0
    %73 = vmatpush.bf16.msra.mxu0 0
    %74 = vmatpush.bf16.msra.mxu0 0
    %75 = vmatpush.bf16.msra.mxu0 0
    %76 = vmatpush.bf16.msra.mxu0 %v63
    %77 = vmatpush.bf16.msra.mxu0 %v62
    %78 = vmatmul.bf16.gmra.mxu0 %v68
    %v79 = vpop.f32.mrf.mxu0
    %v80 = vadd.f32 0.0, %v79
    %v81 = vpop.f32.mrf.mxu0
    %82 = vdwg.mxu0
    %v83 = vcvt.f32.s32.to.zero.pseudo %v80
    %v84 = vand.u32 %v83, 1
    %v85 = vcvt.s32.f32 %v84
    %86 = vst [vmem:[#allocation7] sm:$0x3] %v85
    // Predicated region
    $region18: #{tpu_custom_call.1} parent=1 // pred_check
      _
    $region19: #{tpu_custom_call.1} parent=1 // pred_check_branch
      %88 = sbr.rel (0) target = $region21
    $region20: #{tpu_custom_call.1} parent=1 // pred_region
      %90 = vsyncadd [#allocation4], 0
      %s92 = sshll.u32 [#allocation7], 4
      %s93 = int_to_ptr.vmem [resolvable:$true] %s92
      %s94 = sshll.u32 %s2, 4
      %s95 = int_to_ptr.hbm [resolvable:$true] %s94
      %97 = dma.vmem_to_hbm [thread:$0]  %s93, 32, %s95, [#allocation4]
    $region21: #{tpu_custom_call.1} parent=1 // pred_fallthru
      _
    // Predicated region
    $region22: #{tpu_custom_call.1} parent=1 // pred_check
      _
    $region23: #{tpu_custom_call.1} parent=1 // pred_check_branch
      %99 = sbr.rel (0) target = $region25
    $region24: #{tpu_custom_call.1} parent=1 // pred_region
      %101 = dma.done [#allocation4], 32
    $region25: #{tpu_custom_call.1} parent=1 // pred_fallthru
      _
    %102 = vsyncpa [#allocation3], 1
    %103 = vsyncpa [#allocation6], 1
    %104 = vsyncpa [#allocation4], 1

</llo_original>
